<compile_context>
chip_gen: v7x
topology: tpu7x:2x2x1
jax: 0.10.0
libtpu: 0.0.40
codegen_flags: <defaults>
</compile_context>

<pallas_src>
import math

import jax
import jax.numpy as jnp
from jax.experimental import pallas as pl
from jax.experimental.pallas import tpu as pltpu


def _layer_scale_kernel(x_ref, g_ref, o_ref):
    # x_ref: (tile_n, tile_d) tile of tokens; g_ref: (1, tile_d) gamma row,
    # broadcast over the sublane (row) axis.  Pure VPU elementwise multiply.
    o_ref[...] = x_ref[...] * g_ref[...]


def _sublane_pack(dtype):
    """Rows per packed sublane group for the dtype (f32:8, bf16:16, int8:32)."""
    return max(8, 32 // jnp.dtype(dtype).itemsize)


def _largest_divisor(n, limit, multiple):
    """Largest d with d | n, d <= limit, d % multiple == 0 (0 if none)."""
    best = 0
    d = multiple
    limit = min(limit, n)
    while d <= limit:
        if n % d == 0:
            best = d
        d += multiple
    return best


def layer_scale(x, gamma, *, block_bytes=3 * 1024 * 1024):
    """y = x * gamma with gamma (shape (dim,)) broadcast along the last axis."""
    orig_shape = x.shape
    D = orig_shape[-1]
    assert gamma.shape == (D,), (gamma.shape, D)
    dtype = x.dtype
    gamma = gamma.astype(dtype)
    itemsize = jnp.dtype(dtype).itemsize
    pack = _sublane_pack(dtype)

    x2 = x.reshape(-1, D)
    n_rows, d = x2.shape
    g2 = gamma.reshape(1, D)

    # ---- lane-dense layout: stored last dim must be a multiple of 128 -------
    if d % 128 != 0:
        k = 128 // math.gcd(d, 128)  # smallest k with (k * d) % 128 == 0
        if n_rows % k == 0:
            x2 = x2.reshape(n_rows // k, k * d)
            g2 = jnp.tile(g2, (1, k))
            n_rows, d = x2.shape
        else:
            # No cheap lane-dense layout: a masked-store Pallas kernel would be
            # slower than XLA's fused broadcast multiply, so just use that.
            return x * gamma

    # ---- lane (D) tile: multiple of 128, small enough that a pack-rows slab
    #      still fits the block budget (only wide D actually gets tiled) ------
    if d * itemsize * pack <= block_bytes:
        tile_d = d
    else:
        tile_d = _largest_divisor(d, block_bytes // (itemsize * pack), 128)
        tile_d = tile_d or 128  # 128 always divides d at this point

    # ---- row (N) tile: as large as the block budget allows ------------------
    n_pad = n_rows
    if n_rows * tile_d * itemsize <= block_bytes:
        tile_n = n_rows  # whole row extent in one block (full dim is legal)
    else:
        target = max(pack, (block_bytes // (tile_d * itemsize)) // pack * pack)
        tile_n = _largest_divisor(n_rows, target, pack)
        if tile_n < max(pack, target // 4):
            # No reasonable divisor: pad rows with zeros up to a tile multiple
            # rather than silently falling back to tiny tiles.
            tile_n = target
            n_pad = ((n_rows + tile_n - 1) // tile_n) * tile_n
            x2 = jnp.pad(x2, ((0, n_pad - n_rows), (0, 0)))

    grid = (n_pad // tile_n, d // tile_d)

    cost = pl.CostEstimate(
        flops=n_pad * d,
        transcendentals=0,
        bytes_accessed=2 * n_pad * d * itemsize + d * itemsize,
    )

    out = pl.pallas_call(
        _layer_scale_kernel,
        out_shape=jax.ShapeDtypeStruct((n_pad, d), dtype),
        grid_spec=pltpu.PrefetchScalarGridSpec(
            num_scalar_prefetch=0,
            grid=grid,
            in_specs=[
                pl.BlockSpec((tile_n, tile_d), lambda i, j: (i, j)),  # x tile
                pl.BlockSpec((1, tile_d), lambda i, j: (0, j)),       # gamma row
            ],
            out_specs=pl.BlockSpec((tile_n, tile_d), lambda i, j: (i, j)),
        ),
        compiler_params=pltpu.CompilerParams(
            dimension_semantics=("parallel", "parallel"),
        ),
        cost_estimate=cost,
    )(x2, g2)

    if n_pad != n_rows:
        out = out[:n_rows]
    return out.reshape(orig_shape)


if __name__ == "__main__":
    key = jax.random.PRNGKey(0)
    k1, k2 = jax.random.split(key)
    init_values = 1e-5

    # 1) Small shape matching typical LayerScale usage (exercises the
    #    lane-folding path since D=32 < 128): x (batch=2, seq=8, dim=32).
    B, S, D = 2, 8, 32
    x = jax.random.normal(k1, (B, S, D), dtype=jnp.float32)
    gamma = jnp.full((D,), init_values, dtype=jnp.float32)  # init_values * ones(dim)
    y = jax.block_until_ready(layer_scale(x, gamma))
    assert y.shape == x.shape and y.dtype == x.dtype
    assert jnp.allclose(y, x * gamma, rtol=1e-6, atol=1e-6)

    # 2) Lane-dense D, bf16, non-power-of-two row count, and a deliberately
    #    small block budget so the grid has multiple row tiles (exercises the
    #    tiled path and per-channel gamma indexing).
    B2, S2, D2 = 2, 520, 256  # N = 1040 rows
    x2 = jax.random.normal(k2, (B2, S2, D2), dtype=jnp.bfloat16)
    gamma2 = (init_values * (1.0 + jnp.arange(D2, dtype=jnp.float32))).astype(jnp.bfloat16)
    y2 = jax.block_until_ready(layer_scale(x2, gamma2, block_bytes=64 * 1024))
    assert y2.shape == x2.shape and y2.dtype == x2.dtype
    assert jnp.allclose(
        y2.astype(jnp.float32),
        (x2 * gamma2).astype(jnp.float32),
        rtol=1e-2, atol=1e-6,
    )

    # TODO(synk): the PyTorch `inplace=True` variant (x.mul_) is implemented
    # functionally; in-place aliasing (input_output_aliases) is not wired up.
    print("KERNEL_OK")
</pallas_src>

<mosaic_0001>
module attributes {stable_mosaic.version = 11 : i64} {
  func.func @_layer_scale_kernel(%arg0: i32, %arg1: i32, %arg2: memref<4x128xf32, #tpu.memory_space<vmem>>, %arg3: memref<1x128xf32, #tpu.memory_space<vmem>>, %arg4: memref<4x128xf32, #tpu.memory_space<vmem>>) attributes {dimension_semantics = [#tpu.dimension_semantics<parallel>, #tpu.dimension_semantics<parallel>], iteration_bounds = array<i64: 1, 1>, scalar_prefetch = 0 : i64, scratch_operands = 0 : i64, tpu.core_type = #tpu.core_type<tc>, window_params = [{transform_indices = @transform_0, window_bounds = array<i64: 4, 128>}, {transform_indices = @transform_1, window_bounds = array<i64: 1, 128>}, {transform_indices = @transform_2, window_bounds = array<i64: 4, 128>}]} {
    %c0 = arith.constant 0 : index
    %c0_0 = arith.constant 0 : index
    %0 = vector.load %arg2[%c0, %c0_0] : memref<4x128xf32, #tpu.memory_space<vmem>>, vector<4x128xf32>
    %c0_1 = arith.constant 0 : index
    %c0_2 = arith.constant 0 : index
    %1 = vector.load %arg3[%c0_1, %c0_2] : memref<1x128xf32, #tpu.memory_space<vmem>>, vector<1x128xf32>
    %2 = vector.broadcast %1 : vector<1x128xf32> to vector<4x128xf32>
    %3 = arith.mulf %0, %2 : vector<4x128xf32>
    %c0_3 = arith.constant 0 : index
    %c0_4 = arith.constant 0 : index
    %4 = vector.load %arg4[%c0_3, %c0_4] : memref<4x128xf32, #tpu.memory_space<vmem>>, vector<4x128xf32>
    tpu.vector_store %arg4[%c0_3, %c0_4], %3 {strides = array<i32>} : memref<4x128xf32, #tpu.memory_space<vmem>>, vector<4x128xf32>,
    return
  }
  func.func @transform_0(%arg0: i32, %arg1: i32) -> (i32, i32) {
    %c0_i32 = arith.constant 0 : i32
    return %arg0, %arg1 : i32, i32
  }
  func.func @transform_1(%arg0: i32, %arg1: i32) -> (i32, i32) {
    %c0_i32 = arith.constant 0 : i32
    %c0_i32_0 = arith.constant 0 : i32
    return %c0_i32, %arg1 : i32, i32
  }
  func.func @transform_2(%arg0: i32, %arg1: i32) -> (i32, i32) {
    %c0_i32 = arith.constant 0 : i32
    return %arg0, %arg1 : i32, i32
  }
}

</mosaic_0001>

<llo_original>
// kernel: tpu_custom_call.1
$region0: #{tpu_custom_call.1}
  #allocation0 [shape = 'u32[]', space=smem, size = 0x4, offset = 0x4, fixed_abs, tag = 'smem constant byte address 0x4 - core index']
  #allocation1 [shape = 'u32[144,128]{1,0:T(1,128)}', space=vmem, size = 0x12000, scoped, tag = 'internal scratch']
  %s0 = inlined_call_operand.hbm [shape: f32[4,128], index: 0, kind: input, shape index: {}]
  %s1 = inlined_call_operand.vmem [shape: f32[1,128], index: 1, kind: input, shape index: {}]
  %s2 = inlined_call_operand.hbm [shape: f32[4,128], index: 2, kind: output, shape index: {}]
  %s3 = sld [smem:[#allocation0]]
  $region22: #{tpu_custom_call.1} parent=0
    _
  %s5 = ssub.s32 1, %s3
  %s6 = scalar_select 0, %s5, %s3
  $region1: #{tpu_custom_call.1} parent=0
    #allocation2 [shape = 'u8[2048]{0}', space=vmem, size = 0x800, scoped, tag = 'input window, operand 0, single buffered']
    #allocation3 [shape = 's32[1]{0}', space=sflag, size = 0x4, scoped, tag = 'scoped memory for tpu_custom_call.1']
    #allocation4 [shape = 's32[1]{0}', space=sflag, size = 0x4, scoped, tag = 'scoped memory for tpu_custom_call.1']
    #allocation5 [shape = 'u8[2048]{0}', space=vmem, size = 0x800, scoped, tag = 'output window, operand 0, single buffered']
    %7 = vsyncpa [#allocation3], 0
    %8 = vsyncpa [#allocation4], 0
    // Predicated region
    $region2: #{tpu_custom_call.1} parent=1 // pred_check
      _
    $region3: #{tpu_custom_call.1} parent=1 // pred_check_branch
      %10 = sbr.rel (0) target = $region5
    $region4: #{tpu_custom_call.1} parent=1 // pred_region
      %s12 = ssub.s32 64, 64
      %13 = vsyncadd [#allocation3], %s12
      %s15 = sshll.u32 [#allocation2], 4
      %s16 = int_to_ptr.vmem [resolvable:$true] %s15
      %18 = dma.hbm_to_vmem [thread:$0]  %s0, 64, %s16, [#allocation3]
    $region5: #{tpu_custom_call.1} parent=1 // pred_fallthru
      _
    // Predicated region
    $region6: #{tpu_custom_call.1} parent=1 // pred_check
      _
    $region7: #{tpu_custom_call.1} parent=1 // pred_check_branch
      %20 = sbr.rel (0) target = $region9
    $region8: #{tpu_custom_call.1} parent=1 // pred_region
      _
    $region9: #{tpu_custom_call.1} parent=1 // pred_fallthru
      _
    // Predicated region
    $region10: #{tpu_custom_call.1} parent=1 // pred_check
      _
    $region11: #{tpu_custom_call.1} parent=1 // pred_check_branch
      %22 = sbr.rel (0) target = $region13
    $region12: #{tpu_custom_call.1} parent=1 // pred_region
      %23 = dma.done [#allocation3], 64
    $region13: #{tpu_custom_call.1} parent=1 // pred_fallthru
      _
    %v24 = vld [vmem:[#allocation2] sm:$0xf]
    %v25 = vld [vmem:[%s1] sm:$0x1]
    %v27 = vlaneseq
    %v28 = vshrl.u32 %v27, 7
    %v29 = vsub.s32 0, %v28
    %v30 = vrot.slane %v25, %v29
    %v32 = vmul.f32 %v24, %v30
    %33 = vst [vmem:[#allocation5] sm:$0xf] %v32
    // Predicated region
    $region14: #{tpu_custom_call.1} parent=1 // pred_check
      _
    $region15: #{tpu_custom_call.1} parent=1 // pred_check_branch
      %35 = sbr.rel (0) target = $region17
    $region16: #{tpu_custom_call.1} parent=1 // pred_region
      %s37 = ssub.s32 64, 64
      %38 = vsyncadd [#allocation4], %s37
      %s40 = sshll.u32 [#allocation5], 4
      %s41 = int_to_ptr.vmem [resolvable:$true] %s40
      %43 = dma.vmem_to_hbm [thread:$0]  %s41, 64, %s2, [#allocation4]
    $region17: #{tpu_custom_call.1} parent=1 // pred_fallthru
      _
    // Predicated region
    $region18: #{tpu_custom_call.1} parent=1 // pred_check
      _
    $region19: #{tpu_custom_call.1} parent=1 // pred_check_branch
      %45 = sbr.rel (0) target = $region21
    $region20: #{tpu_custom_call.1} parent=1 // pred_region
      %46 = dma.done [#allocation4], 64
    $region21: #{tpu_custom_call.1} parent=1 // pred_fallthru
      _
    %47 = vsyncpa [#allocation3], 1
    %48 = vsyncpa [#allocation4], 1

</llo_original>
